<compile_context>
chip_gen: v5e
topology: v5e:2x2
jax: 0.10.0
libtpu: 0.0.40
codegen_flags: <defaults>
</compile_context>

<pallas_src>
import functools
import math

import jax
import jax.numpy as jnp
from jax.experimental import pallas as pl
from jax.experimental.pallas import tpu as pltpu


# ------------------------------- kernel ------------------------------------ #

def _mhsa_fused_kernel(x_ref, wqkv_ref, wo_ref, pi_ref, o_ref, *,
                       num_heads, key_dim, channels, hw, use_residual):
    nh, kd, C, HW = num_heads, key_dim, channels, hw
    r = HW // kd
    mxu = wqkv_ref.dtype

    x_f32 = x_ref[0]                                    # [C+1, HW] f32 (last row = 1)
    x_bf = x_f32.astype(mxu)

    # ---- merged q/k/v projection (BN scale/shift, biases, 1/sqrt(head_dim) folded)
    proj = jnp.dot(wqkv_ref[...], x_bf,
                   preferred_element_type=jnp.float32)  # [(nh+2)*kd, HW]
    q = proj[: nh * kd, :].astype(mxu)                  # [nh*kd, HW] (pre-scaled)
    k = proj[nh * kd:(nh + 1) * kd, :].astype(mxu)      # [kd,    HW]
    v = proj[(nh + 1) * kd:, :].astype(mxu)             # [kd,    HW]

    # ---- attention with the literal torch .view semantics ----------------------
    # Column-permute the keys (spatial t = cv*r+ev -> t' = ev*kd+cv) with a one-hot
    # matmul; then the v.view(bs,1,-1,kd) reinterpretation in the SAME t' order is
    # just a sublane-stack of v's kd-wide lane blocks.  Softmax is row-wise, so the
    # simultaneous column/row permutation leaves the result unchanged.
    k_perm = jnp.dot(k, pi_ref[...],
                     preferred_element_type=jnp.float32).astype(mxu)   # [kd, HW]
    v_perm = jnp.concatenate(
        [v[:, e * kd:(e + 1) * kd] for e in range(r)], axis=0)         # [HW, kd]

    # q.view(bs, nh, HW, kd): query row m = c*r + e of head h is column e*kd+d of
    # conv-layout row h*kd+c  ->  loop over e, take a static kd-wide lane slice of q.
    ctx_blocks = []
    for e in range(r):
        q_e = q[:, e * kd:(e + 1) * kd]                                  # [nh*kd, kd]
        s_e = jnp.dot(q_e, k_perm, preferred_element_type=jnp.float32)   # [nh*kd, HW]
        p_e = jnp.exp(s_e - jnp.max(s_e, axis=-1, keepdims=True))
        ctx_e = jnp.dot(p_e.astype(mxu), v_perm,
                        preferred_element_type=jnp.float32)              # [nh*kd, kd]
        # Deferred softmax normalization (kd columns instead of HW).
        ctx_e = ctx_e * pl.reciprocal(jnp.sum(p_e, axis=-1, keepdims=True),
                                      approx=True)
        ctx_blocks.append(ctx_e.astype(mxu))
    # context.view(bs, nh*kd, px, px): per-e context is exactly lane block e.
    ctx = jnp.concatenate(ctx_blocks, axis=-1)                           # [nh*kd, HW]

    # ---- output projection (LayerScale folded into wo) + residual --------------
    out = jnp.dot(wo_ref[...], ctx, preferred_element_type=jnp.float32)  # [C, HW]
    if use_residual:
        out = out + x_f32[:C, :]
    o_ref[0] = out.astype(o_ref.dtype)


# ------------------------------- folding ----------------------------------- #

def _fold_params(params, *, num_heads, key_dim, use_layer_scale, mxu_dtype):
    """Fold inference BN, biases, 1/sqrt(head_dim) and LayerScale into weights."""
    nh, kd = num_heads, key_dim
    head_dim = kd // nh
    eps = 1e-5
    scale = params["bn_w"] / jnp.sqrt(params["bn_var"] + eps)           # [C]
    shift = params["bn_b"] - params["bn_mean"] * scale                  # [C]
    q_scale = 1.0 / math.sqrt(head_dim)

    w = jnp.concatenate([params["wq"] * q_scale, params["wk"], params["wv"]],
                        axis=0)                                         # [(nh+2)*kd, C]
    w_scaled = w * scale[None, :]                                       # BN scale
    bias = w @ shift                                                    # BN shift
    w_qkv = jnp.concatenate([w_scaled, bias[:, None]], axis=1)          # [(nh+2)*kd, C+1]

    wo = params["wo"]
    if use_layer_scale:
        # LayerScale recreates gamma = init_value * ones each forward -> constant.
        wo = wo * 1e-5
    return w_qkv.astype(mxu_dtype), wo.astype(mxu_dtype)


# ------------------------------- wrapper ----------------------------------- #

def mhsa_block(x, params, *, num_heads, key_dim, use_layer_scale=True,
               use_residual=True, mxu_dtype=jnp.bfloat16):
    B, C, H, W = x.shape
    assert H == W, "reference context.view(bs, nh*kd, px, px) assumes H == W"
    HW = H * W
    nh, kd = num_heads, key_dim
    assert HW % kd == 0, "per-e decomposition of the torch .view needs HW % key_dim == 0"
    # TODO(synk): general HW not a multiple of key_dim would need a padded decomposition.
    r = HW // kd

    x2 = x.reshape(B, C, HW).astype(jnp.float32)
    x_aug = jnp.concatenate([x2, jnp.ones((B, 1, HW), jnp.float32)], axis=1)

    w_qkv, wo = _fold_params(params, num_heads=nh, key_dim=kd,
                             use_layer_scale=use_layer_scale, mxu_dtype=mxu_dtype)

    # One-hot lane-permutation matrix: Pi[t, t'] = 1 iff t' = (t % r)*kd + t // r.
    t = jnp.arange(HW)
    perm = (t % r) * kd + (t // r)
    pi = (perm[:, None] == jnp.arange(HW)[None, :]).astype(mxu_dtype)   # [HW, HW]

    flops = int(2 * B * ((nh + 2) * kd * (C + 1) * HW        # merged projection
                         + kd * HW * HW                       # key permutation
                         + 2 * nh * kd * HW * HW              # scores + context
                         + C * nh * kd * HW))                 # output projection
    transcendentals = int(B * nh * kd * HW * r)
    bytes_accessed = int(B * (C + 1) * HW * 4 + (nh + 2) * kd * (C + 1) * 2
                         + C * nh * kd * 2 + HW * HW * 2 + B * C * HW * 4)

    kernel = functools.partial(_mhsa_fused_kernel, num_heads=nh, key_dim=kd,
                               channels=C, hw=HW, use_residual=use_residual)

    out = pl.pallas_call(
        kernel,
        grid=(B,),
        in_specs=[
            pl.BlockSpec((1, C + 1, HW), lambda b: (b, 0, 0)),          # x (+ ones row)
            pl.BlockSpec(((nh + 2) * kd, C + 1), lambda b: (0, 0)),     # merged W_qkv
            pl.BlockSpec((C, nh * kd), lambda b: (0, 0)),               # W_out (scaled)
            pl.BlockSpec((HW, HW), lambda b: (0, 0)),                   # permutation
        ],
        out_specs=pl.BlockSpec((1, C, HW), lambda b: (b, 0, 0)),
        out_shape=jax.ShapeDtypeStruct((B, C, HW), jnp.float32),
        compiler_params=pltpu.CompilerParams(dimension_semantics=("parallel",)),
        cost_estimate=pl.CostEstimate(flops=flops, transcendentals=transcendentals,
                                      bytes_accessed=bytes_accessed),
    )(x_aug, w_qkv, wo, pi)

    return out.reshape(B, C, H, W)


# --------------------------- pure-JAX reference ---------------------------- #

def mhsa_ref(x, params, *, num_heads, key_dim, use_layer_scale=True,
             use_residual=True, mxu_dtype=jnp.float32):
    """Literal torch-.view reference.  mxu_dtype=float32 -> module-spec math;
    mxu_dtype=bfloat16 -> mirrors the kernel's mixed-precision casts."""
    B, C, H, W = x.shape
    HW = H * W
    nh, kd = num_heads, key_dim
    x2 = x.reshape(B, C, HW).astype(jnp.float32)
    x_aug = jnp.concatenate([x2, jnp.ones((B, 1, HW), jnp.float32)], axis=1)

    w_qkv, wo = _fold_params(params, num_heads=nh, key_dim=kd,
                             use_layer_scale=use_layer_scale, mxu_dtype=mxu_dtype)

    proj = jnp.einsum("oc,bcs->bos", w_qkv, x_aug.astype(mxu_dtype),
                      preferred_element_type=jnp.float32)
    q = proj[:, : nh * kd, :].astype(mxu_dtype)
    k = proj[:, nh * kd:(nh + 1) * kd, :].astype(mxu_dtype)
    v = proj[:, (nh + 1) * kd:, :].astype(mxu_dtype)

    # Literal torch .view row-major reinterpretations.
    qv = q.reshape(B, nh, HW, kd)
    kv = k.reshape(B, kd, HW)
    vv = v.reshape(B, HW, kd)

    s = jnp.einsum("bhmd,bdt->bhmt", qv, kv, preferred_element_type=jnp.float32)
    p = jax.nn.softmax(s, axis=-1)
    ctx = jnp.einsum("bhmt,btd->bhmd", p.astype(mxu_dtype), vv,
                     preferred_element_type=jnp.float32)
    ctx = ctx.astype(mxu_dtype).reshape(B, nh * kd, HW)

    out = jnp.einsum("cm,bms->bcs", wo, ctx, preferred_element_type=jnp.float32)
    if use_residual:
        out = out + x2
    return out.reshape(B, C, H, W)


# --------------------------------- main ------------------------------------ #

if __name__ == "__main__":
    B, C, H, W = 2, 16, 8, 8
    num_heads, key_dim = 4, 16

    key = jax.random.PRNGKey(0)
    ks = jax.random.split(key, 9)
    x = jax.random.normal(ks[0], (B, C, H, W), jnp.float32)

    params = {
        "bn_w": 1.0 + 0.1 * jax.random.normal(ks[1], (C,), jnp.float32),
        "bn_b": 0.1 * jax.random.normal(ks[2], (C,), jnp.float32),
        "bn_mean": 0.1 * jax.random.normal(ks[3], (C,), jnp.float32),
        "bn_var": jax.random.uniform(ks[4], (C,), jnp.float32, 0.5, 1.5),
        "wq": jax.random.normal(ks[5], (num_heads * key_dim, C), jnp.float32)
              / math.sqrt(C),
        "wk": jax.random.normal(ks[6], (key_dim, C), jnp.float32) / math.sqrt(C),
        # note: the reference _value_proj also outputs key_dim channels
        "wv": jax.random.normal(ks[7], (key_dim, C), jnp.float32) / math.sqrt(C),
        "wo": jax.random.normal(ks[8], (C, num_heads * key_dim), jnp.float32)
              / math.sqrt(num_heads * key_dim),
    }

    # Default block config: layer scale + residual (checked vs. f32 module math).
    out = mhsa_block(x, params, num_heads=num_heads, key_dim=key_dim,
                     use_layer_scale=True, use_residual=True)
    out = jax.block_until_ready(out)
    assert out.shape == (B, C, H, W)
    assert bool(jnp.all(jnp.isfinite(out)))

    ref_f32 = mhsa_ref(x, params, num_heads=num_heads, key_dim=key_dim,
                       use_layer_scale=True, use_residual=True,
                       mxu_dtype=jnp.float32)
    assert bool(jnp.allclose(out, ref_f32, rtol=1e-3, atol=1e-3))

    # Attention path alone (no layer scale / residual) checked against a reference
    # that mirrors the kernel's bf16 MXU casts.
    out_attn = mhsa_block(x, params, num_heads=num_heads, key_dim=key_dim,
                          use_layer_scale=False, use_residual=False)
    out_attn = jax.block_until_ready(out_attn)
    ref_attn = mhsa_ref(x, params, num_heads=num_heads, key_dim=key_dim,
                        use_layer_scale=False, use_residual=False,
                        mxu_dtype=jnp.bfloat16)
    assert bool(jnp.allclose(out_attn, ref_attn, rtol=2e-2, atol=2e-2))

    print("KERNEL_OK")
</pallas_src>

<mosaic_0001>
module attributes {stable_mosaic.version = 11 : i64} {
  func.func @_mhsa_fused_kernel(%arg0: i32, %arg1: memref<1x17x64xf32, #tpu.memory_space<vmem>>, %arg2: memref<96x17xbf16, #tpu.memory_space<vmem>>, %arg3: memref<16x64xbf16, #tpu.memory_space<vmem>>, %arg4: memref<64x64xbf16, #tpu.memory_space<vmem>>, %arg5: memref<1x16x64xf32, #tpu.memory_space<vmem>>) attributes {dimension_semantics = [#tpu.dimension_semantics<parallel>], iteration_bounds = array<i64: 2>, scalar_prefetch = 0 : i64, scratch_operands = 0 : i64, tpu.core_type = #tpu.core_type<tc>, window_params = [{transform_indices = @transform_0, window_bounds = array<i64: 1, 17, 64>}, {pipeline_mode = #tpu.pipeline_mode<synchronous>, transform_indices = @transform_1, window_bounds = array<i64: 96, 17>}, {pipeline_mode = #tpu.pipeline_mode<synchronous>, transform_indices = @transform_2, window_bounds = array<i64: 16, 64>}, {pipeline_mode = #tpu.pipeline_mode<synchronous>, transform_indices = @transform_3, window_bounds = array<i64: 64, 64>}, {transform_indices = @transform_4, window_bounds = array<i64: 1, 16, 64>}]} {
    %c0 = arith.constant 0 : index
    %c0_0 = arith.constant 0 : index
    %c0_1 = arith.constant 0 : index
    %0 = vector.load %arg1[%c0, %c0_0, %c0_1] : memref<1x17x64xf32, #tpu.memory_space<vmem>>, vector<1x17x64xf32>
    %1 = vector.shape_cast %0 : vector<1x17x64xf32> to vector<17x64xf32>
    %2 = arith.truncf %1 : vector<17x64xf32> to vector<17x64xbf16>
    %c0_2 = arith.constant 0 : index
    %c0_3 = arith.constant 0 : index
    %3 = vector.load %arg2[%c0_2, %c0_3] : memref<96x17xbf16, #tpu.memory_space<vmem>>, vector<96x17xbf16>
    %cst = arith.constant dense<0.000000e+00> : vector<96x64xf32>
    %4 = tpu.matmul %3, %2, %cst {dimension_numbers = #tpu.dot_dimension_numbers<[1], [0], [0], [1], [0, 0, 1, 1], [], []>} : vector<96x17xbf16>, vector<17x64xbf16>, vector<96x64xf32> -> vector<96x64xf32>
    %5 = vector.extract_strided_slice %4 {offsets = [0, 0], sizes = [64, 64], strides = [1, 1]} : vector<96x64xf32> to vector<64x64xf32>
    %6 = arith.truncf %5 : vector<64x64xf32> to vector<64x64xbf16>
    %7 = vector.extract_strided_slice %4 {offsets = [64, 0], sizes = [16, 64], strides = [1, 1]} : vector<96x64xf32> to vector<16x64xf32>
    %8 = arith.truncf %7 : vector<16x64xf32> to vector<16x64xbf16>
    %9 = vector.extract_strided_slice %4 {offsets = [80, 0], sizes = [16, 64], strides = [1, 1]} : vector<96x64xf32> to vector<16x64xf32>
    %10 = arith.truncf %9 : vector<16x64xf32> to vector<16x64xbf16>
    %c0_4 = arith.constant 0 : index
    %c0_5 = arith.constant 0 : index
    %11 = vector.load %arg4[%c0_4, %c0_5] : memref<64x64xbf16, #tpu.memory_space<vmem>>, vector<64x64xbf16>
    %cst_6 = arith.constant dense<0.000000e+00> : vector<16x64xf32>
    %12 = tpu.matmul %8, %11, %cst_6 {dimension_numbers = #tpu.dot_dimension_numbers<[1], [0], [0], [1], [0, 0, 1, 1], [], []>} : vector<16x64xbf16>, vector<64x64xbf16>, vector<16x64xf32> -> vector<16x64xf32>
    %13 = arith.truncf %12 : vector<16x64xf32> to vector<16x64xbf16>
    %14 = vector.extract_strided_slice %10 {offsets = [0, 0], sizes = [16, 16], strides = [1, 1]} : vector<16x64xbf16> to vector<16x16xbf16>
    %15 = vector.extract_strided_slice %10 {offsets = [0, 16], sizes = [16, 16], strides = [1, 1]} : vector<16x64xbf16> to vector<16x16xbf16>
    %16 = vector.extract_strided_slice %10 {offsets = [0, 32], sizes = [16, 16], strides = [1, 1]} : vector<16x64xbf16> to vector<16x16xbf16>
    %17 = vector.extract_strided_slice %10 {offsets = [0, 48], sizes = [16, 16], strides = [1, 1]} : vector<16x64xbf16> to vector<16x16xbf16>
    %18 = tpu.concatenate %14, %15, %16, %17 in 0 : vector<16x16xbf16>, vector<16x16xbf16>, vector<16x16xbf16>, vector<16x16xbf16> -> vector<64x16xbf16>
    %19 = vector.extract_strided_slice %6 {offsets = [0, 0], sizes = [64, 16], strides = [1, 1]} : vector<64x64xbf16> to vector<64x16xbf16>
    %cst_7 = arith.constant dense<0.000000e+00> : vector<64x64xf32>
    %20 = tpu.matmul %19, %13, %cst_7 {dimension_numbers = #tpu.dot_dimension_numbers<[1], [0], [0], [1], [0, 0, 1, 1], [], []>} : vector<64x16xbf16>, vector<16x64xbf16>, vector<64x64xf32> -> vector<64x64xf32>
    %cst_8 = arith.constant dense<0xFF800000> : vector<64xf32>
    %21 = vector.multi_reduction <maximumf>, %20, %cst_8 [1] : vector<64x64xf32> to vector<64xf32>
    %22 = vector.shape_cast %21 : vector<64xf32> to vector<64x1xf32>
    %23 = vector.broadcast %22 : vector<64x1xf32> to vector<64x64xf32>
    %24 = arith.subf %20, %23 : vector<64x64xf32>
    %25 = math.exp %24 : vector<64x64xf32>
    %26 = arith.truncf %25 : vector<64x64xf32> to vector<64x64xbf16>
    %cst_9 = arith.constant dense<0.000000e+00> : vector<64x16xf32>
    %27 = tpu.matmul %26, %18, %cst_9 {dimension_numbers = #tpu.dot_dimension_numbers<[1], [0], [0], [1], [0, 0, 1, 1], [], []>} : vector<64x64xbf16>, vector<64x16xbf16>, vector<64x16xf32> -> vector<64x16xf32>
    %cst_10 = arith.constant dense<0.000000e+00> : vector<64xf32>
    %28 = vector.multi_reduction <add>, %25, %cst_10 [1] : vector<64x64xf32> to vector<64xf32>
    %29 = vector.shape_cast %28 : vector<64xf32> to vector<64x1xf32>
    %30 = tpu.reciprocal %29 {approx = true} : vector<64x1xf32> -> vector<64x1xf32>
    %31 = vector.broadcast %30 : vector<64x1xf32> to vector<64x16xf32>
    %32 = arith.mulf %27, %31 : vector<64x16xf32>
    %33 = arith.truncf %32 : vector<64x16xf32> to vector<64x16xbf16>
    %34 = vector.extract_strided_slice %6 {offsets = [0, 16], sizes = [64, 16], strides = [1, 1]} : vector<64x64xbf16> to vector<64x16xbf16>
    %cst_11 = arith.constant dense<0.000000e+00> : vector<64x64xf32>
    %35 = tpu.matmul %34, %13, %cst_11 {dimension_numbers = #tpu.dot_dimension_numbers<[1], [0], [0], [1], [0, 0, 1, 1], [], []>} : vector<64x16xbf16>, vector<16x64xbf16>, vector<64x64xf32> -> vector<64x64xf32>
    %cst_12 = arith.constant dense<0xFF800000> : vector<64xf32>
    %36 = vector.multi_reduction <maximumf>, %35, %cst_12 [1] : vector<64x64xf32> to vector<64xf32>
    %37 = vector.shape_cast %36 : vector<64xf32> to vector<64x1xf32>
    %38 = vector.broadcast %37 : vector<64x1xf32> to vector<64x64xf32>
    %39 = arith.subf %35, %38 : vector<64x64xf32>
    %40 = math.exp %39 : vector<64x64xf32>
    %41 = arith.truncf %40 : vector<64x64xf32> to vector<64x64xbf16>
    %cst_13 = arith.constant dense<0.000000e+00> : vector<64x16xf32>
    %42 = tpu.matmul %41, %18, %cst_13 {dimension_numbers = #tpu.dot_dimension_numbers<[1], [0], [0], [1], [0, 0, 1, 1], [], []>} : vector<64x64xbf16>, vector<64x16xbf16>, vector<64x16xf32> -> vector<64x16xf32>
    %cst_14 = arith.constant dense<0.000000e+00> : vector<64xf32>
    %43 = vector.multi_reduction <add>, %40, %cst_14 [1] : vector<64x64xf32> to vector<64xf32>
    %44 = vector.shape_cast %43 : vector<64xf32> to vector<64x1xf32>
    %45 = tpu.reciprocal %44 {approx = true} : vector<64x1xf32> -> vector<64x1xf32>
    %46 = vector.broadcast %45 : vector<64x1xf32> to vector<64x16xf32>
    %47 = arith.mulf %42, %46 : vector<64x16xf32>
    %48 = arith.truncf %47 : vector<64x16xf32> to vector<64x16xbf16>
    %49 = vector.extract_strided_slice %6 {offsets = [0, 32], sizes = [64, 16], strides = [1, 1]} : vector<64x64xbf16> to vector<64x16xbf16>
    %cst_15 = arith.constant dense<0.000000e+00> : vector<64x64xf32>
    %50 = tpu.matmul %49, %13, %cst_15 {dimension_numbers = #tpu.dot_dimension_numbers<[1], [0], [0], [1], [0, 0, 1, 1], [], []>} : vector<64x16xbf16>, vector<16x64xbf16>, vector<64x64xf32> -> vector<64x64xf32>
    %cst_16 = arith.constant dense<0xFF800000> : vector<64xf32>
    %51 = vector.multi_reduction <maximumf>, %50, %cst_16 [1] : vector<64x64xf32> to vector<64xf32>
    %52 = vector.shape_cast %51 : vector<64xf32> to vector<64x1xf32>
    %53 = vector.broadcast %52 : vector<64x1xf32> to vector<64x64xf32>
    %54 = arith.subf %50, %53 : vector<64x64xf32>
    %55 = math.exp %54 : vector<64x64xf32>
    %56 = arith.truncf %55 : vector<64x64xf32> to vector<64x64xbf16>
    %cst_17 = arith.constant dense<0.000000e+00> : vector<64x16xf32>
    %57 = tpu.matmul %56, %18, %cst_17 {dimension_numbers = #tpu.dot_dimension_numbers<[1], [0], [0], [1], [0, 0, 1, 1], [], []>} : vector<64x64xbf16>, vector<64x16xbf16>, vector<64x16xf32> -> vector<64x16xf32>
    %cst_18 = arith.constant dense<0.000000e+00> : vector<64xf32>
    %58 = vector.multi_reduction <add>, %55, %cst_18 [1] : vector<64x64xf32> to vector<64xf32>
    %59 = vector.shape_cast %58 : vector<64xf32> to vector<64x1xf32>
    %60 = tpu.reciprocal %59 {approx = true} : vector<64x1xf32> -> vector<64x1xf32>
    %61 = vector.broadcast %60 : vector<64x1xf32> to vector<64x16xf32>
    %62 = arith.mulf %57, %61 : vector<64x16xf32>
    %63 = arith.truncf %62 : vector<64x16xf32> to vector<64x16xbf16>
    %64 = vector.extract_strided_slice %6 {offsets = [0, 48], sizes = [64, 16], strides = [1, 1]} : vector<64x64xbf16> to vector<64x16xbf16>
    %cst_19 = arith.constant dense<0.000000e+00> : vector<64x64xf32>
    %65 = tpu.matmul %64, %13, %cst_19 {dimension_numbers = #tpu.dot_dimension_numbers<[1], [0], [0], [1], [0, 0, 1, 1], [], []>} : vector<64x16xbf16>, vector<16x64xbf16>, vector<64x64xf32> -> vector<64x64xf32>
    %cst_20 = arith.constant dense<0xFF800000> : vector<64xf32>
    %66 = vector.multi_reduction <maximumf>, %65, %cst_20 [1] : vector<64x64xf32> to vector<64xf32>
    %67 = vector.shape_cast %66 : vector<64xf32> to vector<64x1xf32>
    %68 = vector.broadcast %67 : vector<64x1xf32> to vector<64x64xf32>
    %69 = arith.subf %65, %68 : vector<64x64xf32>
    %70 = math.exp %69 : vector<64x64xf32>
    %71 = arith.truncf %70 : vector<64x64xf32> to vector<64x64xbf16>
    %cst_21 = arith.constant dense<0.000000e+00> : vector<64x16xf32>
    %72 = tpu.matmul %71, %18, %cst_21 {dimension_numbers = #tpu.dot_dimension_numbers<[1], [0], [0], [1], [0, 0, 1, 1], [], []>} : vector<64x64xbf16>, vector<64x16xbf16>, vector<64x16xf32> -> vector<64x16xf32>
    %cst_22 = arith.constant dense<0.000000e+00> : vector<64xf32>
    %73 = vector.multi_reduction <add>, %70, %cst_22 [1] : vector<64x64xf32> to vector<64xf32>
    %74 = vector.shape_cast %73 : vector<64xf32> to vector<64x1xf32>
    %75 = tpu.reciprocal %74 {approx = true} : vector<64x1xf32> -> vector<64x1xf32>
    %76 = vector.broadcast %75 : vector<64x1xf32> to vector<64x16xf32>
    %77 = arith.mulf %72, %76 : vector<64x16xf32>
    %78 = arith.truncf %77 : vector<64x16xf32> to vector<64x16xbf16>
    %79 = tpu.concatenate %33, %48, %63, %78 in 1 : vector<64x16xbf16>, vector<64x16xbf16>, vector<64x16xbf16>, vector<64x16xbf16> -> vector<64x64xbf16>
    %c0_23 = arith.constant 0 : index
    %c0_24 = arith.constant 0 : index
    %80 = vector.load %arg3[%c0_23, %c0_24] : memref<16x64xbf16, #tpu.memory_space<vmem>>, vector<16x64xbf16>
    %cst_25 = arith.constant dense<0.000000e+00> : vector<16x64xf32>
    %81 = tpu.matmul %80, %79, %cst_25 {dimension_numbers = #tpu.dot_dimension_numbers<[1], [0], [0], [1], [0, 0, 1, 1], [], []>} : vector<16x64xbf16>, vector<64x64xbf16>, vector<16x64xf32> -> vector<16x64xf32>
    %82 = vector.extract_strided_slice %1 {offsets = [0, 0], sizes = [16, 64], strides = [1, 1]} : vector<17x64xf32> to vector<16x64xf32>
    %83 = arith.addf %81, %82 : vector<16x64xf32>
    %c0_26 = arith.constant 0 : index
    %c0_27 = arith.constant 0 : index
    %c0_28 = arith.constant 0 : index
    %84 = vector.load %arg5[%c0_26, %c0_27, %c0_28] : memref<1x16x64xf32, #tpu.memory_space<vmem>>, vector<1x16x64xf32>
    %85 = vector.shape_cast %84 : vector<1x16x64xf32> to vector<16x64xf32>
    %86 = vector.shape_cast %83 : vector<16x64xf32> to vector<1x16x64xf32>
    tpu.vector_store %arg5[%c0_26, %c0_27, %c0_28], %86 {strides = array<i32>} : memref<1x16x64xf32, #tpu.memory_space<vmem>>, vector<1x16x64xf32>,
    return
  }
  func.func @transform_0(%arg0: i32) -> (i32, i32, i32) {
    %c0_i32 = arith.constant 0 : i32
    %c0_i32_0 = arith.constant 0 : i32
    %c0_i32_1 = arith.constant 0 : i32
    return %arg0, %c0_i32, %c0_i32_0 : i32, i32, i32
  }
  func.func @transform_1(%arg0: i32) -> (i32, i32) {
    %c0_i32 = arith.constant 0 : i32
    %c0_i32_0 = arith.constant 0 : i32
    %c0_i32_1 = arith.constant 0 : i32
    return %c0_i32, %c0_i32_0 : i32, i32
  }
  func.func @transform_2(%arg0: i32) -> (i32, i32) {
    %c0_i32 = arith.constant 0 : i32
    %c0_i32_0 = arith.constant 0 : i32
    %c0_i32_1 = arith.constant 0 : i32
    return %c0_i32, %c0_i32_0 : i32, i32
  }
  func.func @transform_3(%arg0: i32) -> (i32, i32) {
    %c0_i32 = arith.constant 0 : i32
    %c0_i32_0 = arith.constant 0 : i32
    %c0_i32_1 = arith.constant 0 : i32
    return %c0_i32, %c0_i32_0 : i32, i32
  }
  func.func @transform_4(%arg0: i32) -> (i32, i32, i32) {
    %c0_i32 = arith.constant 0 : i32
    %c0_i32_0 = arith.constant 0 : i32
    %c0_i32_1 = arith.constant 0 : i32
    return %arg0, %c0_i32, %c0_i32_0 : i32, i32, i32
  }
}

</mosaic_0001>

<llo_original>
// kernel: tpu_custom_call.1
$region0: #{tpu_custom_call.1}
  #allocation0 [shape = 'u32[]', space=smem, size = 0x4, offset = 0x4, fixed_abs, tag = 'smem constant byte address 0x4 - core index']
  #allocation1 [shape = 'u32[72,128]{1,0:T(1,128)}', space=vmem, size = 0x9000, scoped, tag = 'internal scratch']
  %s0 = inlined_call_operand.vmem [shape: f32[2,17,64], index: 0, kind: input, shape index: {}]
  %s1 = inlined_call_operand.vmem [shape: bf16[96,17], index: 1, kind: input, shape index: {}]
  %s2 = inlined_call_operand.vmem [shape: bf16[16,64], index: 2, kind: input, shape index: {}]
  %s3 = inlined_call_operand.vmem [shape: bf16[64,64], index: 3, kind: input, shape index: {}]
  %s4 = inlined_call_operand.hbm [shape: f32[2,16,64], index: 4, kind: output, shape index: {}]
  %s5 = sld [smem:[#allocation0]]
  $region49: #{tpu_custom_call.1} parent=0
    _
  %s7 = ssub.s32 1, %s5
  %s8 = scalar_select 0, %s7, %s5
  $region1: #{tpu_custom_call.1} parent=0
    #allocation2 [shape = 'u8[16384]{0}', space=vmem, size = 0x4000, scoped, tag = 'output window, operand 0']
    #allocation3 [shape = 's32[2]{0}', space=sflag, size = 0x8, scoped, tag = 'scoped memory for tpu_custom_call.1']
    %9 = vsyncpa [#allocation3], 0
    %s10 = scalar_lea.sflag [#allocation3], 1
    %11 = vsyncpa %s10, 0
    loop: start=0, step=1, limit=4
    $region2: #{tpu_custom_call.1} parent=1 // loop_pre_header
      _
    $region3: #{tpu_custom_call.1} parent=1 // loop_header
      %s13 = sphi 0, %s17
      %p14 = scmp.ge.s32.totalorder %s13, 4
      %s23 = sphi 0, %s25
      %s26 = sphi 0, %s23
      %s27 = sphi 0, %s26
      %s43 = sphi 0, %s27
      %s47 = sphi 0, %s47
      %s49 = sphi 0, %s47
      %s50 = sphi 0, %s49
      %s64 = sphi 0, %s50
      %s68 = sphi 0, %s68
      %s70 = sphi 0, %s68
      %s71 = sphi 0, %s70
      %s85 = sphi 0, %s71
      %s89 = sphi 0, %s89
      %s91 = sphi 0, %s89
      %s92 = sphi 0, %s91
      %s106 = sphi 0, %s92
      %s112 = sphi 0, %s114
      %s115 = sphi 0, %s112
      %s116 = sphi 0, %s115
      %s132 = sphi 0, %s116
    $region4: #{tpu_custom_call.1} parent=1 // loop_header_branch
      %16 = sbr.rel (%p14) target = $region8
    $region5: #{tpu_custom_call.1} parent=1 // loop_body
      %s18 = ssub.s32 %s13, 1
      %s19 = ssub.s32 %s13, 2
      %s20 = sadd.s32 %s13, 1
      %s21 = ssub.s32 %s13, %s20
      %p22 = scmp.eq.s32.totalorder %s21, 0
      %s24 = sadd.s32 %s23, 1
      %s25 = scalar_select %p22, %s23, %s24
      %p28 = pneg %p22
      %p29 = scmp.eq.s32.totalorder %s13, 1
      %p30 = por %p28, %p29
      %p31 = scmp.ne.s32.totalorder %s23, %s26
      %p32 = scmp.eq.s32.totalorder %s13, 0
      %p33 = por %p31, %p32
      %p34 = scmp.ne.s32.totalorder %s23, %s26
      %p35 = scmp.eq.s32.totalorder %s18, 1
      %p36 = por %p34, %p35
      %p37 = scmp.ne.s32.totalorder %s26, %s27
      %p38 = scmp.eq.s32.totalorder %s18, 0
      %p39 = por %p37, %p38
      %p40 = scmp.ne.s32.totalorder %s26, %s27
      %p41 = scmp.eq.s32.totalorder %s19, 1
      %p42 = por %p40, %p41
      %p44 = scmp.ne.s32.totalorder %s27, %s43
      %p45 = scmp.eq.s32.totalorder %s19, 0
      %p46 = por %p44, %p45
      %s48 = sadd.s32 %s47, 1
      %p51 = scmp.eq.s32.totalorder %s13, 1
      %p52 = scmp.ne.s32.totalorder %s47, %s49
      %p53 = scmp.eq.s32.totalorder %s13, 0
      %p54 = por %p52, %p53
      %p55 = scmp.ne.s32.totalorder %s47, %s49
      %p56 = scmp.eq.s32.totalorder %s18, 1
      %p57 = por %p55, %p56
      %p58 = scmp.ne.s32.totalorder %s49, %s50
      %p59 = scmp.eq.s32.totalorder %s18, 0
      %p60 = por %p58, %p59
      %p61 = scmp.ne.s32.totalorder %s49, %s50
      %p62 = scmp.eq.s32.totalorder %s19, 1
      %p63 = por %p61, %p62
      %p65 = scmp.ne.s32.totalorder %s50, %s64
      %p66 = scmp.eq.s32.totalorder %s19, 0
      %p67 = por %p65, %p66
      %s69 = sadd.s32 %s68, 1
      %p72 = scmp.eq.s32.totalorder %s13, 1
      %p73 = scmp.ne.s32.totalorder %s68, %s70
      %p74 = scmp.eq.s32.totalorder %s13, 0
      %p75 = por %p73, %p74
      %p76 = scmp.ne.s32.totalorder %s68, %s70
      %p77 = scmp.eq.s32.totalorder %s18, 1
      %p78 = por %p76, %p77
      %p79 = scmp.ne.s32.totalorder %s70, %s71
      %p80 = scmp.eq.s32.totalorder %s18, 0
      %p81 = por %p79, %p80
      %p82 = scmp.ne.s32.totalorder %s70, %s71
      %p83 = scmp.eq.s32.totalorder %s19, 1
      %p84 = por %p82, %p83
      %p86 = scmp.ne.s32.totalorder %s71, %s85
      %p87 = scmp.eq.s32.totalorder %s19, 0
      %p88 = por %p86, %p87
      %s90 = sadd.s32 %s89, 1
      %p93 = scmp.eq.s32.totalorder %s13, 1
      %p94 = scmp.ne.s32.totalorder %s89, %s91
      %p95 = scmp.eq.s32.totalorder %s13, 0
      %p96 = por %p94, %p95
      %p97 = scmp.ne.s32.totalorder %s89, %s91
      %p98 = scmp.eq.s32.totalorder %s18, 1
      %p99 = por %p97, %p98
      %p100 = scmp.ne.s32.totalorder %s91, %s92
      %p101 = scmp.eq.s32.totalorder %s18, 0
      %p102 = por %p100, %p101
      %p103 = scmp.ne.s32.totalorder %s91, %s92
      %p104 = scmp.eq.s32.totalorder %s19, 1
      %p105 = por %p103, %p104
      %p107 = scmp.ne.s32.totalorder %s92, %s106
      %p108 = scmp.eq.s32.totalorder %s19, 0
      %p109 = por %p107, %p108
      %s110 = ssub.s32 %s13, %s20
      %p111 = scmp.eq.s32.totalorder %s110, 0
      %s113 = sadd.s32 %s112, 1
      %s114 = scalar_select %p111, %s112, %s113
      %p117 = pneg %p111
      %p118 = scmp.eq.s32.totalorder %s13, 1
      %p119 = por %p117, %p118
      %p120 = scmp.ne.s32.totalorder %s112, %s115
      %p121 = scmp.eq.s32.totalorder %s13, 0
      %p122 = por %p120, %p121
      %p123 = scmp.ne.s32.totalorder %s112, %s115
      %p124 = scmp.eq.s32.totalorder %s18, 1
      %p125 = por %p123, %p124
      %p126 = scmp.ne.s32.totalorder %s115, %s116
      %p127 = scmp.eq.s32.totalorder %s18, 0
      %p128 = por %p126, %p127
      %p129 = scmp.ne.s32.totalorder %s115, %s116
      %p130 = scmp.eq.s32.totalorder %s19, 1
      %p131 = por %p129, %p130
      %p133 = scmp.ne.s32.totalorder %s116, %s132
      %p134 = scmp.eq.s32.totalorder %s19, 0
      %p135 = por %p133, %p134
      %p136 = scmp.le.s32.totalorder 1, %s13
      %p137 = scmp.lt.s32.totalorder %s13, 3
      %p138 = pnand %p136, %p137
      %p139 = pneg %p138
      // Predicated region
      $region9: #{tpu_custom_call.1} parent=5 // pred_check
        _
      $region10: #{tpu_custom_call.1} parent=5 // pred_check_branch
        %141 = sbr.rel (%p138) target = $region12
      $region11: #{tpu_custom_call.1} parent=5 // pred_region
        %s142 = ssub.s32 %s13, 1
        // Predicated region
        $region13: #{tpu_custom_call.1} parent=11 // pred_check
          %p143 = pneg %p60
        $region14: #{tpu_custom_call.1} parent=11 // pred_check_branch
          %145 = sbr.rel (%p143) target = $region16
        $region15: #{tpu_custom_call.1} parent=11 // pred_region
          _
        $region16: #{tpu_custom_call.1} parent=11 // pred_fallthru
          _
        // Predicated region
        $region17: #{tpu_custom_call.1} parent=11 // pred_check
          %p146 = pneg %p81
        $region18: #{tpu_custom_call.1} parent=11 // pred_check_branch
          %148 = sbr.rel (%p146) target = $region20
        $region19: #{tpu_custom_call.1} parent=11 // pred_region
          _
        $region20: #{tpu_custom_call.1} parent=11 // pred_fallthru
          _
        // Predicated region
        $region21: #{tpu_custom_call.1} parent=11 // pred_check
          %p149 = pneg %p102
        $region22: #{tpu_custom_call.1} parent=11 // pred_check_branch
          %151 = sbr.rel (%p149) target = $region24
        $region23: #{tpu_custom_call.1} parent=11 // pred_region
          _
        $region24: #{tpu_custom_call.1} parent=11 // pred_fallthru
          _
      $region12: #{tpu_custom_call.1} parent=5 // pred_fallthru
        _
      %p152 = scmp.lt.s32.totalorder %s13, 2
      // Predicated region
      $region25: #{tpu_custom_call.1} parent=5 // pred_check
        %p153 = pneg %p152
      $region26: #{tpu_custom_call.1} parent=5 // pred_check_branch
        %155 = sbr.rel (%p153) target = $region28
      $region27: #{tpu_custom_call.1} parent=5 // pred_region
        // Predicated region
        $region29: #{tpu_custom_call.1} parent=27 // pred_check
          %p156 = pneg %p33
        $region30: #{tpu_custom_call.1} parent=27 // pred_check_branch
          %158 = sbr.rel (%p156) target = $region32
        $region31: #{tpu_custom_call.1} parent=27 // pred_region
          %p159 = scmp.lt.s32.totalorder %s13, 1
          %s160 = scalar_select %p159, %s13, 1
          %s161 = smul.addr %s160, 3
          %s162 = smul.addr %s161, 8
          %s163 = scalar_lea.vmem %s0, %s162
        $region32: #{tpu_custom_call.1} parent=27 // pred_fallthru
          _
      $region28: #{tpu_custom_call.1} parent=5 // pred_fallthru
        _
      %p164 = scmp.le.s32.totalorder 1, %s13
      %p165 = scmp.lt.s32.totalorder %s13, 3
      %p166 = pnand %p164, %p165
      %p167 = pneg %p166
      // Predicated region
      $region33: #{tpu_custom_call.1} parent=5 // pred_check
        _
      $region34: #{tpu_custom_call.1} parent=5 // pred_check_branch
        %169 = sbr.rel (%p166) target = $region36
      $region35: #{tpu_custom_call.1} parent=5 // pred_region
        %s170 = ssub.s32 %s13, 1
        %p171 = scmp.lt.s32.totalorder %s18, 1
        %s172 = scalar_select %p171, %s18, 1
        %s173 = smul.addr %s172, 3
        %s174 = smul.addr %s173, 8
        %s175 = scalar_lea.vmem %s0, %s174
        %p176 = pneg %p39
        %p177 = pneg %p36
        %p178 = pneg %p60
        %p179 = pneg %p57
        %p180 = pneg %p81
        %p181 = pneg %p78
        %p182 = pneg %p102
        %p183 = pneg %p99
        %p184 = pneg %p128
        %p185 = pneg %p125
        %s186 = sand.u32 %s115, 1
        %s187 = scalar_lea.sflag [#allocation3], %s186
        %s188 = sand.u32 %s115, 1
        %s189 = smul.addr %s188, 16
        %s190 = scalar_lea.vmem [#allocation2], %s189
        %p191 = scmp.lt.s32.totalorder %s18, 1
        %s192 = scalar_select %p191, %s18, 1
        %s193 = smul.addr %s192, 3
        %s194 = smul.addr %s193, 8
        %s195 = scalar_lea.vmem %s0, %s194
        %v197 = vld [vmem:[%s195] sm:$0xff]
        %v198 = vld [vmem:[%s195 + $0x8] sm:$0xff]
        %v199 = vld [vmem:[%s195 + $0x10] sm:$0x1]
        %v200 = vpack.c.bf16 %v198, %v197
        %v201 = vpack.c.bf16 %v199, %v199
        %v202 = vld [vmem:[%s1] sm:$0xf]
        %v203 = vld [vmem:[%s1 + $0x4] sm:$0xf]
        %v204 = vld [vmem:[%s1 + $0x8] sm:$0xf]
        %v205 = vld [vmem:[%s1 + $0xc] sm:$0xf]
        %v206 = vld [vmem:[%s1 + $0x10] sm:$0xf]
        %v207 = vld [vmem:[%s1 + $0x14] sm:$0xf]
        %v208 = vld [vmem:[%s1 + $0x18] sm:$0xf]
        %v209 = vld [vmem:[%s1 + $0x1c] sm:$0xf]
        %v210 = vld [vmem:[%s1 + $0x20] sm:$0xf]
        %v211 = vld [vmem:[%s1 + $0x24] sm:$0xf]
        %v212 = vld [vmem:[%s1 + $0x28] sm:$0xf]
        %v213 = vld [vmem:[%s1 + $0x2c] sm:$0xf]
        %v226 = vunpack.c.l.b16 %v202
        %v227 = vunpack.c.l.b16 %v203
        %v228 = vunpack.c.l.b16 %v204
        %v229 = vunpack.c.l.b16 %v205
        %v230 = vunpack.c.l.b16 %v206
        %v231 = vunpack.c.l.b16 %v207
        %v232 = vunpack.c.l.b16 %v208
        %v233 = vunpack.c.l.b16 %v209
        %v234 = vunpack.c.l.b16 %v210
        %v235 = vunpack.c.l.b16 %v211
        %v236 = vunpack.c.l.b16 %v212
        %v237 = vunpack.c.l.b16 %v213
        %v238 = vpack.c.b16 %v227, %v226
        %v239 = vpack.c.b16 %v229, %v228
        %v240 = vpack.c.b16 %v231, %v230
        %v241 = vpack.c.b16 %v233, %v232
        %v242 = vpack.c.b16 %v235, %v234
        %v243 = vpack.c.b16 %v237, %v236
        %vm244 = vcmask 138240
        %v246 = vsel %vm244, %v238, 0
        %v249 = vsel %vm244, %v239, 0
        %v252 = vsel %vm244, %v240, 0
        %v255 = vsel %vm244, %v241, 0
        %v258 = vsel %vm244, %v242, 0
        %v261 = vsel %vm244, %v243, 0
        %vm263 = vcmask 1040384
        %v264 = vsel 0, 4294967295, 65535
        %v265 = vsel %vm263, %v264, 0
        %v267 = vand.u32 %v201, %v265
        %269 = vmatpush.bf16.msra.mxu0 0
        %270 = vmatpush.bf16.msra.mxu0 0
        %271 = vmatpush.bf16.msra.mxu0 0
        %272 = vmatpush.bf16.msra.mxu0 0
        %273 = vmatpush.bf16.msra.mxu0 0
        %274 = vmatpush.bf16.msra.mxu0 0
        %275 = vmatpush.bf16.msra.mxu0 %v267
        %276 = vmatpush.bf16.msra.mxu0 %v200
        %277 = vmatmul.bf16.gmra.mxu0 %v246
        %v278 = vpop.f32.mrf.mxu0
        %v279 = vadd.f32 0.0, %v278
        %v280 = vpop.f32.mrf.mxu0
        %v281 = vadd.f32 0.0, %v280
        %282 = vmatmul.bf16.gmra.mxu0 %v249
        %v283 = vpop.f32.mrf.mxu0
        %v284 = vadd.f32 0.0, %v283
        %v285 = vpop.f32.mrf.mxu0
        %v286 = vadd.f32 0.0, %v285
        %287 = vmatmul.bf16.gmra.mxu0 %v252
        %v288 = vpop.f32.mrf.mxu0
        %v289 = vadd.f32 0.0, %v288
        %v290 = vpop.f32.mrf.mxu0
        %v291 = vadd.f32 0.0, %v290
        %292 = vmatmul.bf16.gmra.mxu0 %v255
        %v293 = vpop.f32.mrf.mxu0
        %v294 = vadd.f32 0.0, %v293
        %v295 = vpop.f32.mrf.mxu0
        %v296 = vadd.f32 0.0, %v295
        %297 = vmatmul.bf16.gmra.mxu0 %v258
        %v298 = vpop.f32.mrf.mxu0
        %v299 = vadd.f32 0.0, %v298
        %v300 = vpop.f32.mrf.mxu0
        %v301 = vadd.f32 0.0, %v300
        %302 = vmatmul.bf16.gmra.mxu0 %v261
        %v303 = vpop.f32.mrf.mxu0
        %v304 = vadd.f32 0.0, %v303
        %v305 = vpop.f32.mrf.mxu0
        %v306 = vadd.f32 0.0, %v305
        %307 = vdwg.mxu0
        %v308 = vpack.c.bf16 %v279, %v279
        %v309 = vpack.c.bf16 %v281, %v281
        %v310 = vpack.c.bf16 %v284, %v284
        %v311 = vpack.c.bf16 %v286, %v286
        %v312 = vpack.c.bf16 %v289, %v289
        %v313 = vpack.c.bf16 %v291, %v291
        %v314 = vpack.c.bf16 %v294, %v294
        %v315 = vpack.c.bf16 %v296, %v296
        %v316 = vpack.c.bf16 %v301, %v299
        %v317 = vpack.c.bf16 %v304, %v304
        %v318 = vpack.c.bf16 %v306, %v306
        %v319 = vld [vmem:[%s3] sm:$0xf]
        %v320 = vld [vmem:[%s3 + $0x4] sm:$0xf]
        %v321 = vld [vmem:[%s3 + $0x8] sm:$0xf]
        %v322 = vld [vmem:[%s3 + $0xc] sm:$0xf]
        %v323 = vld [vmem:[%s3 + $0x10] sm:$0xf]
        %v324 = vld [vmem:[%s3 + $0x14] sm:$0xf]
        %v325 = vld [vmem:[%s3 + $0x18] sm:$0xf]
        %v326 = vld [vmem:[%s3 + $0x1c] sm:$0xf]
        %v335 = vunpack.c.l.b16 %v319
        %v336 = vunpack.c.l.b16 %v320
        %v337 = vunpack.c.l.b16 %v321
        %v338 = vunpack.c.l.b16 %v322
        %v339 = vunpack.c.l.b16 %v323
        %v340 = vunpack.c.l.b16 %v324
        %v341 = vunpack.c.l.b16 %v325
        %v342 = vunpack.c.l.b16 %v326
        %v343 = vpack.c.b16 %v336, %v335
        %v344 = vpack.c.b16 %v338, %v337
        %v345 = vpack.c.b16 %v340, %v339
        %v346 = vpack.c.b16 %v342, %v341
        %vm351 = vcmask 523264
        %v353 = vsel %vm351, %v316, 0
        %355 = vmatpush.bf16.msra.mxu0 0
        %356 = vmatpush.bf16.msra.mxu0 0
        %357 = vmatpush.bf16.msra.mxu0 0
        %358 = vmatpush.bf16.msra.mxu0 0
        %359 = vmatpush.bf16.msra.mxu0 %v346
        %360 = vmatpush.bf16.msra.mxu0 %v345
        %361 = vmatpush.bf16.msra.mxu0 %v344
        %362 = vmatpush.bf16.msra.mxu0 %v343
        %363 = vmatmul.bf16.gmra.mxu0 %v353
        %v364 = vpop.f32.mrf.mxu0
        %v365 = vadd.f32 0.0, %v364
        %v366 = vpop.f32.mrf.mxu0
        %v367 = vadd.f32 0.0, %v366
        %368 = vdwg.mxu0
        %v369 = vpack.c.bf16 %v367, %v365
        %v372 = vunpack.c.l.b16 %v317
        %v373 = vunpack.c.l.b16 %v318
        %v374 = vpack.c.b16 %v373, %v372
        %376 = vrot.lane.b32.xlu0 %v374, 112
        %v377 = vpop.permute.xlu0 %376
        %379 = vrot.lane.b32.xlu0 %v374, 96
        %v380 = vpop.permute.xlu0 %379
        %382 = vrot.lane.b32.xlu0 %v374, 80
        %v383 = vpop.permute.xlu0 %382
        %v393 = vunpack.c.l.b16 %v308
        %v394 = vunpack.c.l.b16 %v309
        %v395 = vunpack.c.l.b16 %v310
        %v396 = vunpack.c.l.b16 %v311
        %v397 = vunpack.c.l.b16 %v312
        %v398 = vunpack.c.l.b16 %v313
        %v399 = vunpack.c.l.b16 %v314
        %v400 = vunpack.c.l.b16 %v315
        %v401 = vpack.c.b16 %v394, %v393
        %v402 = vpack.c.b16 %v396, %v395
        %v403 = vpack.c.b16 %v398, %v397
        %v404 = vpack.c.b16 %v400, %v399
        %vm405 = vcmask 130048
        %v407 = vsel %vm405, %v401, 0
        %v410 = vsel %vm405, %v402, 0
        %v413 = vsel %vm405, %v403, 0
        %v416 = vsel %vm405, %v404, 0
        %418 = vmatpush.bf16.msra.mxu0 0
        %419 = vmatpush.bf16.msra.mxu0 0
        %420 = vmatpush.bf16.msra.mxu0 0
        %421 = vmatpush.bf16.msra.mxu0 0
        %422 = vmatpush.bf16.msra.mxu0 0
        %423 = vmatpush.bf16.msra.mxu0 0
        %424 = vmatpush.bf16.msra.mxu0 0
        %425 = vmatpush.bf16.msra.mxu0 %v369
        %426 = vmatmul.bf16.gmra.mxu0 %v407
        %v427 = vpop.f32.mrf.mxu0
        %v428 = vadd.f32 0.0, %v427
        %v429 = vpop.f32.mrf.mxu0
        %v430 = vadd.f32 0.0, %v429
        %431 = vmatmul.bf16.gmra.mxu0 %v410
        %v432 = vpop.f32.mrf.mxu0
        %v433 = vadd.f32 0.0, %v432
        %v434 = vpop.f32.mrf.mxu0
        %v435 = vadd.f32 0.0, %v434
        %436 = vmatmul.bf16.gmra.mxu0 %v413
        %v437 = vpop.f32.mrf.mxu0
        %v438 = vadd.f32 0.0, %v437
        %v439 = vpop.f32.mrf.mxu0
        %v440 = vadd.f32 0.0, %v439
        %441 = vmatmul.bf16.gmra.mxu0 %v416
        %v442 = vpop.f32.mrf.mxu0
        %v443 = vadd.f32 0.0, %v442
        %v444 = vpop.f32.mrf.mxu0
        %v445 = vadd.f32 0.0, %v444
        %446 = vdwg.mxu0
        %v447 = vsel %vm351, %v428, -inf
        %448 = vmax.xlane.f32.xlu0 %v447
        %v449 = vpop.xlane.xlu0 %448
        %v450 = vsel %vm351, %v430, -inf
        %451 = vmax.xlane.f32.xlu0 %v450
        %v452 = vpop.xlane.xlu0 %451
        %v453 = vsel %vm351, %v433, -inf
        %454 = vmax.xlane.f32.xlu0 %v453
        %v455 = vpop.xlane.xlu0 %454
        %v456 = vsel %vm351, %v435, -inf
        %457 = vmax.xlane.f32.xlu0 %v456
        %v458 = vpop.xlane.xlu0 %457
        %v459 = vsel %vm351, %v438, -inf
        %460 = vmax.xlane.f32.xlu0 %v459
        %v461 = vpop.xlane.xlu0 %460
        %v462 = vsel %vm351, %v440, -inf
        %463 = vmax.xlane.f32.xlu0 %v462
        %v464 = vpop.xlane.xlu0 %463
        %v465 = vsel %vm351, %v443, -inf
        %466 = vmax.xlane.f32.xlu0 %v465
        %v467 = vpop.xlane.xlu0 %466
        %v468 = vsel %vm351, %v445, -inf
        %469 = vmax.xlane.f32.xlu0 %v468
        %v470 = vpop.xlane.xlu0 %469
        %v471 = vsub.f32 %v428, %v449
        %v472 = vsub.f32 %v430, %v452
        %v473 = vsub.f32 %v433, %v455
        %v474 = vsub.f32 %v435, %v458
        %v475 = vsub.f32 %v438, %v461
        %v476 = vsub.f32 %v440, %v464
        %v477 = vsub.f32 %v443, %v467
        %v478 = vsub.f32 %v445, %v470
        %v479 = vmul.f32 %v471, 1.442695
        %v480 = vpow.pop %v479
        %v481 = vmul.f32 %v472, 1.442695
        %v482 = vpow.pop %v481
        %v483 = vmul.f32 %v473, 1.442695
        %v484 = vpow.pop %v483
        %v485 = vmul.f32 %v474, 1.442695
        %v486 = vpow.pop %v485
        %v487 = vmul.f32 %v475, 1.442695
        %v488 = vpow.pop %v487
        %v489 = vmul.f32 %v476, 1.442695
        %v490 = vpow.pop %v489
        %v491 = vmul.f32 %v477, 1.442695
        %v492 = vpow.pop %v491
        %v493 = vmul.f32 %v478, 1.442695
        %v494 = vpow.pop %v493
        %v495 = vpack.c.bf16 %v482, %v480
        %v496 = vpack.c.bf16 %v486, %v484
        %v497 = vpack.c.bf16 %v490, %v488
        %v498 = vpack.c.bf16 %v494, %v492
        %v500 = vsel %vm351, %v495, 0
        %v503 = vsel %vm351, %v496, 0
        %v506 = vsel %vm351, %v497, 0
        %v509 = vsel %vm351, %v498, 0
        %511 = vmatpush.bf16.msra.mxu0 0
        %512 = vmatpush.bf16.msra.mxu0 0
        %513 = vmatpush.bf16.msra.mxu0 0
        %514 = vmatpush.bf16.msra.mxu0 0
        %515 = vmatpush.bf16.msra.mxu0 %v383
        %516 = vmatpush.bf16.msra.mxu0 %v380
        %517 = vmatpush.bf16.msra.mxu0 %v377
        %518 = vmatpush.bf16.msra.mxu0 %v374
        %519 = vmatmul.bf16.gmra.mxu0 %v500
        %v520 = vpop.f32.mrf.mxu0
        %v521 = vadd.f32 0.0, %v520
        %v522 = vpop.f32.mrf.mxu0
        %v523 = vadd.f32 0.0, %v522
        %524 = vmatmul.bf16.gmra.mxu0 %v503
        %v525 = vpop.f32.mrf.mxu0
        %v526 = vadd.f32 0.0, %v525
        %v527 = vpop.f32.mrf.mxu0
        %v528 = vadd.f32 0.0, %v527
        %529 = vmatmul.bf16.gmra.mxu0 %v506
        %v530 = vpop.f32.mrf.mxu0
        %v531 = vadd.f32 0.0, %v530
        %v532 = vpop.f32.mrf.mxu0
        %v533 = vadd.f32 0.0, %v532
        %534 = vmatmul.bf16.gmra.mxu0 %v509
        %v535 = vpop.f32.mrf.mxu0
        %v536 = vadd.f32 0.0, %v535
        %v537 = vpop.f32.mrf.mxu0
        %v538 = vadd.f32 0.0, %v537
        %539 = vdwg.mxu0
        %v540 = vsel %vm351, %v480, 0.0
        %541 = vadd.xlane.f32.xlu0 %v540
        %v542 = vpop.xlane.xlu0 %541
        %v543 = vsel %vm351, %v482, 0.0
        %544 = vadd.xlane.f32.xlu0 %v543
        %v545 = vpop.xlane.xlu0 %544
        %v546 = vsel %vm351, %v484, 0.0
        %547 = vadd.xlane.f32.xlu0 %v546
        %v548 = vpop.xlane.xlu0 %547
        %v549 = vsel %vm351, %v486, 0.0
        %550 = vadd.xlane.f32.xlu0 %v549
        %v551 = vpop.xlane.xlu0 %550
        %v552 = vsel %vm351, %v488, 0.0
        %553 = vadd.xlane.f32.xlu0 %v552
        %v554 = vpop.xlane.xlu0 %553
        %v555 = vsel %vm351, %v490, 0.0
        %556 = vadd.xlane.f32.xlu0 %v555
        %v557 = vpop.xlane.xlu0 %556
        %v558 = vsel %vm351, %v492, 0.0
        %559 = vadd.xlane.f32.xlu0 %v558
        %v560 = vpop.xlane.xlu0 %559
        %v561 = vsel %vm351, %v494, 0.0
        %562 = vadd.xlane.f32.xlu0 %v561
        %v563 = vpop.xlane.xlu0 %562
        %v564 = vrcp.pop %v542
        %v565 = vrcp.pop %v545
        %v566 = vrcp.pop %v548
        %v567 = vrcp.pop %v551
        %v568 = vrcp.pop %v554
        %v569 = vrcp.pop %v557
        %v570 = vrcp.pop %v560
        %v571 = vrcp.pop %v563
        %v572 = vmul.f32 %v521, %v564
        %v573 = vmul.f32 %v523, %v565
        %v574 = vmul.f32 %v526, %v566
        %v575 = vmul.f32 %v528, %v567
        %v576 = vmul.f32 %v531, %v568
        %v577 = vmul.f32 %v533, %v569
        %v578 = vmul.f32 %v536, %v570
        %v579 = vmul.f32 %v538, %v571
        %v580 = vpack.c.bf16 %v572, %v572
        %v581 = vpack.c.bf16 %v573, %v573
        %v582 = vpack.c.bf16 %v574, %v574
        %v583 = vpack.c.bf16 %v575, %v575
        %v584 = vpack.c.bf16 %v576, %v576
        %v585 = vpack.c.bf16 %v577, %v577
        %v586 = vpack.c.bf16 %v578, %v578
        %v587 = vpack.c.bf16 %v579, %v579
        %588 = vrot.lane.b32.xlu0 %v401, 112
        %v589 = vpop.permute.xlu0 %588
        %590 = vrot.lane.b32.xlu0 %v402, 112
        %v591 = vpop.permute.xlu0 %590
        %592 = vrot.lane.b32.xlu0 %v403, 112
        %v593 = vpop.permute.xlu0 %592
        %594 = vrot.lane.b32.xlu0 %v404, 112
        %v595 = vpop.permute.xlu0 %594
        %v597 = vsel %vm405, %v589, 0
        %v600 = vsel %vm405, %v591, 0
        %v603 = vsel %vm405, %v593, 0
        %v606 = vsel %vm405, %v595, 0
        %608 = vmatpush.bf16.msra.mxu0 0
        %609 = vmatpush.bf16.msra.mxu0 0
        %610 = vmatpush.bf16.msra.mxu0 0
        %611 = vmatpush.bf16.msra.mxu0 0
        %612 = vmatpush.bf16.msra.mxu0 0
        %613 = vmatpush.bf16.msra.mxu0 0
        %614 = vmatpush.bf16.msra.mxu0 0
        %615 = vmatpush.bf16.msra.mxu0 %v369
        %616 = vmatmul.bf16.gmra.mxu0 %v597
        %v617 = vpop.f32.mrf.mxu0
        %v618 = vadd.f32 0.0, %v617
        %v619 = vpop.f32.mrf.mxu0
        %v620 = vadd.f32 0.0, %v619
        %621 = vmatmul.bf16.gmra.mxu0 %v600
        %v622 = vpop.f32.mrf.mxu0
        %v623 = vadd.f32 0.0, %v622
        %v624 = vpop.f32.mrf.mxu0
        %v625 = vadd.f32 0.0, %v624
        %626 = vmatmul.bf16.gmra.mxu0 %v603
        %v627 = vpop.f32.mrf.mxu0
        %v628 = vadd.f32 0.0, %v627
        %v629 = vpop.f32.mrf.mxu0
        %v630 = vadd.f32 0.0, %v629
        %631 = vmatmul.bf16.gmra.mxu0 %v606
        %v632 = vpop.f32.mrf.mxu0
        %v633 = vadd.f32 0.0, %v632
        %v634 = vpop.f32.mrf.mxu0
        %v635 = vadd.f32 0.0, %v634
        %636 = vdwg.mxu0
        %v637 = vsel %vm351, %v618, -inf
        %638 = vmax.xlane.f32.xlu0 %v637
        %v639 = vpop.xlane.xlu0 %638
        %v640 = vsel %vm351, %v620, -inf
        %641 = vmax.xlane.f32.xlu0 %v640
        %v642 = vpop.xlane.xlu0 %641
        %v643 = vsel %vm351, %v623, -inf
        %644 = vmax.xlane.f32.xlu0 %v643
        %v645 = vpop.xlane.xlu0 %644
        %v646 = vsel %vm351, %v625, -inf
        %647 = vmax.xlane.f32.xlu0 %v646
        %v648 = vpop.xlane.xlu0 %647
        %v649 = vsel %vm351, %v628, -inf
        %650 = vmax.xlane.f32.xlu0 %v649
        %v651 = vpop.xlane.xlu0 %650
        %v652 = vsel %vm351, %v630, -inf
        %653 = vmax.xlane.f32.xlu0 %v652
        %v654 = vpop.xlane.xlu0 %653
        %v655 = vsel %vm351, %v633, -inf
        %656 = vmax.xlane.f32.xlu0 %v655
        %v657 = vpop.xlane.xlu0 %656
        %v658 = vsel %vm351, %v635, -inf
        %659 = vmax.xlane.f32.xlu0 %v658
        %v660 = vpop.xlane.xlu0 %659
        %v661 = vsub.f32 %v618, %v639
        %v662 = vsub.f32 %v620, %v642
        %v663 = vsub.f32 %v623, %v645
        %v664 = vsub.f32 %v625, %v648
        %v665 = vsub.f32 %v628, %v651
        %v666 = vsub.f32 %v630, %v654
        %v667 = vsub.f32 %v633, %v657
        %v668 = vsub.f32 %v635, %v660
        %v669 = vmul.f32 %v661, 1.442695
        %v670 = vpow.pop %v669
        %v671 = vmul.f32 %v662, 1.442695
        %v672 = vpow.pop %v671
        %v673 = vmul.f32 %v663, 1.442695
        %v674 = vpow.pop %v673
        %v675 = vmul.f32 %v664, 1.442695
        %v676 = vpow.pop %v675
        %v677 = vmul.f32 %v665, 1.442695
        %v678 = vpow.pop %v677
        %v679 = vmul.f32 %v666, 1.442695
        %v680 = vpow.pop %v679
        %v681 = vmul.f32 %v667, 1.442695
        %v682 = vpow.pop %v681
        %v683 = vmul.f32 %v668, 1.442695
        %v684 = vpow.pop %v683
        %v685 = vpack.c.bf16 %v672, %v670
        %v686 = vpack.c.bf16 %v676, %v674
        %v687 = vpack.c.bf16 %v680, %v678
        %v688 = vpack.c.bf16 %v684, %v682
        %v690 = vsel %vm351, %v685, 0
        %v693 = vsel %vm351, %v686, 0
        %v696 = vsel %vm351, %v687, 0
        %v699 = vsel %vm351, %v688, 0
        %701 = vmatpush.bf16.msra.mxu0 0
        %702 = vmatpush.bf16.msra.mxu0 0
        %703 = vmatpush.bf16.msra.mxu0 0
        %704 = vmatpush.bf16.msra.mxu0 0
        %705 = vmatpush.bf16.msra.mxu0 %v383
        %706 = vmatpush.bf16.msra.mxu0 %v380
        %707 = vmatpush.bf16.msra.mxu0 %v377
        %708 = vmatpush.bf16.msra.mxu0 %v374
        %709 = vmatmul.bf16.gmra.mxu0 %v690
        %v710 = vpop.f32.mrf.mxu0
        %v711 = vadd.f32 0.0, %v710
        %v712 = vpop.f32.mrf.mxu0
        %v713 = vadd.f32 0.0, %v712
        %714 = vmatmul.bf16.gmra.mxu0 %v693
        %v715 = vpop.f32.mrf.mxu0
        %v716 = vadd.f32 0.0, %v715
        %v717 = vpop.f32.mrf.mxu0
        %v718 = vadd.f32 0.0, %v717
        %719 = vmatmul.bf16.gmra.mxu0 %v696
        %v720 = vpop.f32.mrf.mxu0
        %v721 = vadd.f32 0.0, %v720
        %v722 = vpop.f32.mrf.mxu0
        %v723 = vadd.f32 0.0, %v722
        %724 = vmatmul.bf16.gmra.mxu0 %v699
        %v725 = vpop.f32.mrf.mxu0
        %v726 = vadd.f32 0.0, %v725
        %v727 = vpop.f32.mrf.mxu0
        %v728 = vadd.f32 0.0, %v727
        %729 = vdwg.mxu0
        %v730 = vsel %vm351, %v670, 0.0
        %731 = vadd.xlane.f32.xlu0 %v730
        %v732 = vpop.xlane.xlu0 %731
        %v733 = vsel %vm351, %v672, 0.0
        %734 = vadd.xlane.f32.xlu0 %v733
        %v735 = vpop.xlane.xlu0 %734
        %v736 = vsel %vm351, %v674, 0.0
        %737 = vadd.xlane.f32.xlu0 %v736
        %v738 = vpop.xlane.xlu0 %737
        %v739 = vsel %vm351, %v676, 0.0
        %740 = vadd.xlane.f32.xlu0 %v739
        %v741 = vpop.xlane.xlu0 %740
        %v742 = vsel %vm351, %v678, 0.0
        %743 = vadd.xlane.f32.xlu0 %v742
        %v744 = vpop.xlane.xlu0 %743
        %v745 = vsel %vm351, %v680, 0.0
        %746 = vadd.xlane.f32.xlu0 %v745
        %v747 = vpop.xlane.xlu0 %746
        %v748 = vsel %vm351, %v682, 0.0
        %749 = vadd.xlane.f32.xlu0 %v748
        %v750 = vpop.xlane.xlu0 %749
        %v751 = vsel %vm351, %v684, 0.0
        %752 = vadd.xlane.f32.xlu0 %v751
        %v753 = vpop.xlane.xlu0 %752
        %v754 = vrcp.pop %v732
        %v755 = vrcp.pop %v735
        %v756 = vrcp.pop %v738
        %v757 = vrcp.pop %v741
        %v758 = vrcp.pop %v744
        %v759 = vrcp.pop %v747
        %v760 = vrcp.pop %v750
        %v761 = vrcp.pop %v753
        %v762 = vmul.f32 %v711, %v754
        %v763 = vmul.f32 %v713, %v755
        %v764 = vmul.f32 %v716, %v756
        %v765 = vmul.f32 %v718, %v757
        %v766 = vmul.f32 %v721, %v758
        %v767 = vmul.f32 %v723, %v759
        %v768 = vmul.f32 %v726, %v760
        %v769 = vmul.f32 %v728, %v761
        %v770 = vpack.c.bf16 %v762, %v762
        %v771 = vpack.c.bf16 %v763, %v763
        %v772 = vpack.c.bf16 %v764, %v764
        %v773 = vpack.c.bf16 %v765, %v765
        %v774 = vpack.c.bf16 %v766, %v766
        %v775 = vpack.c.bf16 %v767, %v767
        %v776 = vpack.c.bf16 %v768, %v768
        %v777 = vpack.c.bf16 %v769, %v769
        %778 = vrot.lane.b32.xlu0 %v401, 96
        %v779 = vpop.permute.xlu0 %778
        %780 = vrot.lane.b32.xlu0 %v402, 96
        %v781 = vpop.permute.xlu0 %780
        %782 = vrot.lane.b32.xlu0 %v403, 96
        %v783 = vpop.permute.xlu0 %782
        %784 = vrot.lane.b32.xlu0 %v404, 96
        %v785 = vpop.permute.xlu0 %784
        %v787 = vsel %vm405, %v779, 0
        %v790 = vsel %vm405, %v781, 0
        %v793 = vsel %vm405, %v783, 0
        %v796 = vsel %vm405, %v785, 0
        %798 = vmatpush.bf16.msra.mxu0 0
        %799 = vmatpush.bf16.msra.mxu0 0
        %800 = vmatpush.bf16.msra.mxu0 0
        %801 = vmatpush.bf16.msra.mxu0 0
        %802 = vmatpush.bf16.msra.mxu0 0
        %803 = vmatpush.bf16.msra.mxu0 0
        %804 = vmatpush.bf16.msra.mxu0 0
        %805 = vmatpush.bf16.msra.mxu0 %v369
        %806 = vmatmul.bf16.gmra.mxu0 %v787
        %v807 = vpop.f32.mrf.mxu0
        %v808 = vadd.f32 0.0, %v807
        %v809 = vpop.f32.mrf.mxu0
        %v810 = vadd.f32 0.0, %v809
        %811 = vmatmul.bf16.gmra.mxu0 %v790
        %v812 = vpop.f32.mrf.mxu0
        %v813 = vadd.f32 0.0, %v812
        %v814 = vpop.f32.mrf.mxu0
        %v815 = vadd.f32 0.0, %v814
        %816 = vmatmul.bf16.gmra.mxu0 %v793
        %v817 = vpop.f32.mrf.mxu0
        %v818 = vadd.f32 0.0, %v817
        %v819 = vpop.f32.mrf.mxu0
        %v820 = vadd.f32 0.0, %v819
        %821 = vmatmul.bf16.gmra.mxu0 %v796
        %v822 = vpop.f32.mrf.mxu0
        %v823 = vadd.f32 0.0, %v822
        %v824 = vpop.f32.mrf.mxu0
        %v825 = vadd.f32 0.0, %v824
        %826 = vdwg.mxu0
        %v827 = vsel %vm351, %v808, -inf
        %828 = vmax.xlane.f32.xlu0 %v827
        %v829 = vpop.xlane.xlu0 %828
        %v830 = vsel %vm351, %v810, -inf
        %831 = vmax.xlane.f32.xlu0 %v830
        %v832 = vpop.xlane.xlu0 %831
        %v833 = vsel %vm351, %v813, -inf
        %834 = vmax.xlane.f32.xlu0 %v833
        %v835 = vpop.xlane.xlu0 %834
        %v836 = vsel %vm351, %v815, -inf
        %837 = vmax.xlane.f32.xlu0 %v836
        %v838 = vpop.xlane.xlu0 %837
        %v839 = vsel %vm351, %v818, -inf
        %840 = vmax.xlane.f32.xlu0 %v839
        %v841 = vpop.xlane.xlu0 %840
        %v842 = vsel %vm351, %v820, -inf
        %843 = vmax.xlane.f32.xlu0 %v842
        %v844 = vpop.xlane.xlu0 %843
        %v845 = vsel %vm351, %v823, -inf
        %846 = vmax.xlane.f32.xlu0 %v845
        %v847 = vpop.xlane.xlu0 %846
        %v848 = vsel %vm351, %v825, -inf
        %849 = vmax.xlane.f32.xlu0 %v848
        %v850 = vpop.xlane.xlu0 %849
        %v851 = vsub.f32 %v808, %v829
        %v852 = vsub.f32 %v810, %v832
        %v853 = vsub.f32 %v813, %v835
        %v854 = vsub.f32 %v815, %v838
        %v855 = vsub.f32 %v818, %v841
        %v856 = vsub.f32 %v820, %v844
        %v857 = vsub.f32 %v823, %v847
        %v858 = vsub.f32 %v825, %v850
        %v859 = vmul.f32 %v851, 1.442695
        %v860 = vpow.pop %v859
        %v861 = vmul.f32 %v852, 1.442695
        %v862 = vpow.pop %v861
        %v863 = vmul.f32 %v853, 1.442695
        %v864 = vpow.pop %v863
        %v865 = vmul.f32 %v854, 1.442695
        %v866 = vpow.pop %v865
        %v867 = vmul.f32 %v855, 1.442695
        %v868 = vpow.pop %v867
        %v869 = vmul.f32 %v856, 1.442695
        %v870 = vpow.pop %v869
        %v871 = vmul.f32 %v857, 1.442695
        %v872 = vpow.pop %v871
        %v873 = vmul.f32 %v858, 1.442695
        %v874 = vpow.pop %v873
        %v875 = vpack.c.bf16 %v862, %v860
        %v876 = vpack.c.bf16 %v866, %v864
        %v877 = vpack.c.bf16 %v870, %v868
        %v878 = vpack.c.bf16 %v874, %v872
        %v880 = vsel %vm351, %v875, 0
        %v883 = vsel %vm351, %v876, 0
        %v886 = vsel %vm351, %v877, 0
        %v889 = vsel %vm351, %v878, 0
        %891 = vmatpush.bf16.msra.mxu0 0
        %892 = vmatpush.bf16.msra.mxu0 0
        %893 = vmatpush.bf16.msra.mxu0 0
        %894 = vmatpush.bf16.msra.mxu0 0
        %895 = vmatpush.bf16.msra.mxu0 %v383
        %896 = vmatpush.bf16.msra.mxu0 %v380
        %897 = vmatpush.bf16.msra.mxu0 %v377
        %898 = vmatpush.bf16.msra.mxu0 %v374
        %899 = vmatmul.bf16.gmra.mxu0 %v880
        %v900 = vpop.f32.mrf.mxu0
        %v901 = vadd.f32 0.0, %v900
        %v902 = vpop.f32.mrf.mxu0
        %v903 = vadd.f32 0.0, %v902
        %904 = vmatmul.bf16.gmra.mxu0 %v883
        %v905 = vpop.f32.mrf.mxu0
        %v906 = vadd.f32 0.0, %v905
        %v907 = vpop.f32.mrf.mxu0
        %v908 = vadd.f32 0.0, %v907
        %909 = vmatmul.bf16.gmra.mxu0 %v886
        %v910 = vpop.f32.mrf.mxu0
        %v911 = vadd.f32 0.0, %v910
        %v912 = vpop.f32.mrf.mxu0
        %v913 = vadd.f32 0.0, %v912
        %914 = vmatmul.bf16.gmra.mxu0 %v889
        %v915 = vpop.f32.mrf.mxu0
        %v916 = vadd.f32 0.0, %v915
        %v917 = vpop.f32.mrf.mxu0
        %v918 = vadd.f32 0.0, %v917
        %919 = vdwg.mxu0
        %v920 = vsel %vm351, %v860, 0.0
        %921 = vadd.xlane.f32.xlu0 %v920
        %v922 = vpop.xlane.xlu0 %921
        %v923 = vsel %vm351, %v862, 0.0
        %924 = vadd.xlane.f32.xlu0 %v923
        %v925 = vpop.xlane.xlu0 %924
        %v926 = vsel %vm351, %v864, 0.0
        %927 = vadd.xlane.f32.xlu0 %v926
        %v928 = vpop.xlane.xlu0 %927
        %v929 = vsel %vm351, %v866, 0.0
        %930 = vadd.xlane.f32.xlu0 %v929
        %v931 = vpop.xlane.xlu0 %930
        %v932 = vsel %vm351, %v868, 0.0
        %933 = vadd.xlane.f32.xlu0 %v932
        %v934 = vpop.xlane.xlu0 %933
        %v935 = vsel %vm351, %v870, 0.0
        %936 = vadd.xlane.f32.xlu0 %v935
        %v937 = vpop.xlane.xlu0 %936
        %v938 = vsel %vm351, %v872, 0.0
        %939 = vadd.xlane.f32.xlu0 %v938
        %v940 = vpop.xlane.xlu0 %939
        %v941 = vsel %vm351, %v874, 0.0
        %942 = vadd.xlane.f32.xlu0 %v941
        %v943 = vpop.xlane.xlu0 %942
        %v944 = vrcp.pop %v922
        %v945 = vrcp.pop %v925
        %v946 = vrcp.pop %v928
        %v947 = vrcp.pop %v931
        %v948 = vrcp.pop %v934
        %v949 = vrcp.pop %v937
        %v950 = vrcp.pop %v940
        %v951 = vrcp.pop %v943
        %v952 = vmul.f32 %v901, %v944
        %v953 = vmul.f32 %v903, %v945
        %v954 = vmul.f32 %v906, %v946
        %v955 = vmul.f32 %v908, %v947
        %v956 = vmul.f32 %v911, %v948
        %v957 = vmul.f32 %v913, %v949
        %v958 = vmul.f32 %v916, %v950
        %v959 = vmul.f32 %v918, %v951
        %v960 = vpack.c.bf16 %v952, %v952
        %v961 = vpack.c.bf16 %v953, %v953
        %v962 = vpack.c.bf16 %v954, %v954
        %v963 = vpack.c.bf16 %v955, %v955
        %v964 = vpack.c.bf16 %v956, %v956
        %v965 = vpack.c.bf16 %v957, %v957
        %v966 = vpack.c.bf16 %v958, %v958
        %v967 = vpack.c.bf16 %v959, %v959
        %968 = vrot.lane.b32.xlu0 %v401, 80
        %v969 = vpop.permute.xlu0 %968
        %970 = vrot.lane.b32.xlu0 %v402, 80
        %v971 = vpop.permute.xlu0 %970
        %972 = vrot.lane.b32.xlu0 %v403, 80
        %v973 = vpop.permute.xlu0 %972
        %974 = vrot.lane.b32.xlu0 %v404, 80
        %v975 = vpop.permute.xlu0 %974
        %v977 = vsel %vm405, %v969, 0
        %v980 = vsel %vm405, %v971, 0
        %v983 = vsel %vm405, %v973, 0
        %v986 = vsel %vm405, %v975, 0
        %988 = vmatpush.bf16.msra.mxu0 0
        %989 = vmatpush.bf16.msra.mxu0 0
        %990 = vmatpush.bf16.msra.mxu0 0
        %991 = vmatpush.bf16.msra.mxu0 0
        %992 = vmatpush.bf16.msra.mxu0 0
        %993 = vmatpush.bf16.msra.mxu0 0
        %994 = vmatpush.bf16.msra.mxu0 0
        %995 = vmatpush.bf16.msra.mxu0 %v369
        %996 = vmatmul.bf16.gmra.mxu0 %v977
        %v997 = vpop.f32.mrf.mxu0
        %v998 = vadd.f32 0.0, %v997
        %v999 = vpop.f32.mrf.mxu0
        %v1000 = vadd.f32 0.0, %v999
        %1001 = vmatmul.bf16.gmra.mxu0 %v980
        %v1002 = vpop.f32.mrf.mxu0
        %v1003 = vadd.f32 0.0, %v1002
        %v1004 = vpop.f32.mrf.mxu0
        %v1005 = vadd.f32 0.0, %v1004
        %1006 = vmatmul.bf16.gmra.mxu0 %v983
        %v1007 = vpop.f32.mrf.mxu0
        %v1008 = vadd.f32 0.0, %v1007
        %v1009 = vpop.f32.mrf.mxu0
        %v1010 = vadd.f32 0.0, %v1009
        %1011 = vmatmul.bf16.gmra.mxu0 %v986
        %v1012 = vpop.f32.mrf.mxu0
        %v1013 = vadd.f32 0.0, %v1012
        %v1014 = vpop.f32.mrf.mxu0
        %v1015 = vadd.f32 0.0, %v1014
        %1016 = vdwg.mxu0
        %v1017 = vsel %vm351, %v998, -inf
        %1018 = vmax.xlane.f32.xlu0 %v1017
        %v1019 = vpop.xlane.xlu0 %1018
        %v1020 = vsel %vm351, %v1000, -inf
        %1021 = vmax.xlane.f32.xlu0 %v1020
        %v1022 = vpop.xlane.xlu0 %1021
        %v1023 = vsel %vm351, %v1003, -inf
        %1024 = vmax.xlane.f32.xlu0 %v1023
        %v1025 = vpop.xlane.xlu0 %1024
        %v1026 = vsel %vm351, %v1005, -inf
        %1027 = vmax.xlane.f32.xlu0 %v1026
        %v1028 = vpop.xlane.xlu0 %1027
        %v1029 = vsel %vm351, %v1008, -inf
        %1030 = vmax.xlane.f32.xlu0 %v1029
        %v1031 = vpop.xlane.xlu0 %1030
        %v1032 = vsel %vm351, %v1010, -inf
        %1033 = vmax.xlane.f32.xlu0 %v1032
        %v1034 = vpop.xlane.xlu0 %1033
        %v1035 = vsel %vm351, %v1013, -inf
        %1036 = vmax.xlane.f32.xlu0 %v1035
        %v1037 = vpop.xlane.xlu0 %1036
        %v1038 = vsel %vm351, %v1015, -inf
        %1039 = vmax.xlane.f32.xlu0 %v1038
        %v1040 = vpop.xlane.xlu0 %1039
        %v1041 = vsub.f32 %v998, %v1019
        %v1042 = vsub.f32 %v1000, %v1022
        %v1043 = vsub.f32 %v1003, %v1025
        %v1044 = vsub.f32 %v1005, %v1028
        %v1045 = vsub.f32 %v1008, %v1031
        %v1046 = vsub.f32 %v1010, %v1034
        %v1047 = vsub.f32 %v1013, %v1037
        %v1048 = vsub.f32 %v1015, %v1040
        %v1049 = vmul.f32 %v1041, 1.442695
        %v1050 = vpow.pop %v1049
        %v1051 = vmul.f32 %v1042, 1.442695
        %v1052 = vpow.pop %v1051
        %v1053 = vmul.f32 %v1043, 1.442695
        %v1054 = vpow.pop %v1053
        %v1055 = vmul.f32 %v1044, 1.442695
        %v1056 = vpow.pop %v1055
        %v1057 = vmul.f32 %v1045, 1.442695
        %v1058 = vpow.pop %v1057
        %v1059 = vmul.f32 %v1046, 1.442695
        %v1060 = vpow.pop %v1059
        %v1061 = vmul.f32 %v1047, 1.442695
        %v1062 = vpow.pop %v1061
        %v1063 = vmul.f32 %v1048, 1.442695
        %v1064 = vpow.pop %v1063
        %v1065 = vpack.c.bf16 %v1052, %v1050
        %v1066 = vpack.c.bf16 %v1056, %v1054
        %v1067 = vpack.c.bf16 %v1060, %v1058
        %v1068 = vpack.c.bf16 %v1064, %v1062
        %v1070 = vsel %vm351, %v1065, 0
        %v1073 = vsel %vm351, %v1066, 0
        %v1076 = vsel %vm351, %v1067, 0
        %v1079 = vsel %vm351, %v1068, 0
        %1081 = vmatpush.bf16.msra.mxu0 0
        %1082 = vmatpush.bf16.msra.mxu0 0
        %1083 = vmatpush.bf16.msra.mxu0 0
        %1084 = vmatpush.bf16.msra.mxu0 0
        %1085 = vmatpush.bf16.msra.mxu0 %v383
        %1086 = vmatpush.bf16.msra.mxu0 %v380
        %1087 = vmatpush.bf16.msra.mxu0 %v377
        %1088 = vmatpush.bf16.msra.mxu0 %v374
        %1089 = vmatmul.bf16.gmra.mxu0 %v1070
        %v1090 = vpop.f32.mrf.mxu0
        %v1091 = vadd.f32 0.0, %v1090
        %v1092 = vpop.f32.mrf.mxu0
        %v1093 = vadd.f32 0.0, %v1092
        %1094 = vmatmul.bf16.gmra.mxu0 %v1073
        %v1095 = vpop.f32.mrf.mxu0
        %v1096 = vadd.f32 0.0, %v1095
        %v1097 = vpop.f32.mrf.mxu0
        %v1098 = vadd.f32 0.0, %v1097
        %1099 = vmatmul.bf16.gmra.mxu0 %v1076
        %v1100 = vpop.f32.mrf.mxu0
        %v1101 = vadd.f32 0.0, %v1100
        %v1102 = vpop.f32.mrf.mxu0
        %v1103 = vadd.f32 0.0, %v1102
        %1104 = vmatmul.bf16.gmra.mxu0 %v1079
        %v1105 = vpop.f32.mrf.mxu0
        %v1106 = vadd.f32 0.0, %v1105
        %v1107 = vpop.f32.mrf.mxu0
        %v1108 = vadd.f32 0.0, %v1107
        %1109 = vdwg.mxu0
        %v1110 = vsel %vm351, %v1050, 0.0
        %1111 = vadd.xlane.f32.xlu0 %v1110
        %v1112 = vpop.xlane.xlu0 %1111
        %v1113 = vsel %vm351, %v1052, 0.0
        %1114 = vadd.xlane.f32.xlu0 %v1113
        %v1115 = vpop.xlane.xlu0 %1114
        %v1116 = vsel %vm351, %v1054, 0.0
        %1117 = vadd.xlane.f32.xlu0 %v1116
        %v1118 = vpop.xlane.xlu0 %1117
        %v1119 = vsel %vm351, %v1056, 0.0
        %1120 = vadd.xlane.f32.xlu0 %v1119
        %v1121 = vpop.xlane.xlu0 %1120
        %v1122 = vsel %vm351, %v1058, 0.0
        %1123 = vadd.xlane.f32.xlu0 %v1122
        %v1124 = vpop.xlane.xlu0 %1123
        %v1125 = vsel %vm351, %v1060, 0.0
        %1126 = vadd.xlane.f32.xlu0 %v1125
        %v1127 = vpop.xlane.xlu0 %1126
        %v1128 = vsel %vm351, %v1062, 0.0
        %1129 = vadd.xlane.f32.xlu0 %v1128
        %v1130 = vpop.xlane.xlu0 %1129
        %v1131 = vsel %vm351, %v1064, 0.0
        %1132 = vadd.xlane.f32.xlu0 %v1131
        %v1133 = vpop.xlane.xlu0 %1132
        %v1134 = vrcp.pop %v1112
        %v1135 = vrcp.pop %v1115
        %v1136 = vrcp.pop %v1118
        %v1137 = vrcp.pop %v1121
        %v1138 = vrcp.pop %v1124
        %v1139 = vrcp.pop %v1127
        %v1140 = vrcp.pop %v1130
        %v1141 = vrcp.pop %v1133
        %v1142 = vmul.f32 %v1091, %v1134
        %v1143 = vmul.f32 %v1093, %v1135
        %v1144 = vmul.f32 %v1096, %v1136
        %v1145 = vmul.f32 %v1098, %v1137
        %v1146 = vmul.f32 %v1101, %v1138
        %v1147 = vmul.f32 %v1103, %v1139
        %v1148 = vmul.f32 %v1106, %v1140
        %v1149 = vmul.f32 %v1108, %v1141
        %v1150 = vpack.c.bf16 %v1142, %v1142
        %v1151 = vpack.c.bf16 %v1143, %v1143
        %v1152 = vpack.c.bf16 %v1144, %v1144
        %v1153 = vpack.c.bf16 %v1145, %v1145
        %v1154 = vpack.c.bf16 %v1146, %v1146
        %v1155 = vpack.c.bf16 %v1147, %v1147
        %v1156 = vpack.c.bf16 %v1148, %v1148
        %v1157 = vpack.c.bf16 %v1149, %v1149
        %v1166 = vunpack.c.l.b16 %v580
        %v1167 = vunpack.c.l.b16 %v581
        %v1168 = vunpack.c.l.b16 %v582
        %v1169 = vunpack.c.l.b16 %v583
        %v1170 = vunpack.c.l.b16 %v584
        %v1171 = vunpack.c.l.b16 %v585
        %v1172 = vunpack.c.l.b16 %v586
        %v1173 = vunpack.c.l.b16 %v587
        %v1174 = vpack.c.b16 %v1167, %v1166
        %v1175 = vpack.c.b16 %v1169, %v1168
        %v1176 = vpack.c.b16 %v1171, %v1170
        %v1177 = vpack.c.b16 %v1173, %v1172
        %v1186 = vunpack.c.l.b16 %v770
        %v1187 = vunpack.c.l.b16 %v771
        %v1188 = vunpack.c.l.b16 %v772
        %v1189 = vunpack.c.l.b16 %v773
        %v1190 = vunpack.c.l.b16 %v774
        %v1191 = vunpack.c.l.b16 %v775
        %v1192 = vunpack.c.l.b16 %v776
        %v1193 = vunpack.c.l.b16 %v777
        %v1194 = vpack.c.b16 %v1187, %v1186
        %v1195 = vpack.c.b16 %v1189, %v1188
        %v1196 = vpack.c.b16 %v1191, %v1190
        %v1197 = vpack.c.b16 %v1193, %v1192
        %1198 = vrot.lane.b32.xlu0 %v1194, 16
        %v1199 = vpop.permute.xlu0 %1198
        %1200 = vrot.lane.b32.xlu0 %v1195, 16
        %v1201 = vpop.permute.xlu0 %1200
        %1202 = vrot.lane.b32.xlu0 %v1196, 16
        %v1203 = vpop.permute.xlu0 %1202
        %1204 = vrot.lane.b32.xlu0 %v1197, 16
        %v1205 = vpop.permute.xlu0 %1204
        %v1214 = vunpack.c.l.b16 %v960
        %v1215 = vunpack.c.l.b16 %v961
        %v1216 = vunpack.c.l.b16 %v962
        %v1217 = vunpack.c.l.b16 %v963
        %v1218 = vunpack.c.l.b16 %v964
        %v1219 = vunpack.c.l.b16 %v965
        %v1220 = vunpack.c.l.b16 %v966
        %v1221 = vunpack.c.l.b16 %v967
        %v1222 = vpack.c.b16 %v1215, %v1214
        %v1223 = vpack.c.b16 %v1217, %v1216
        %v1224 = vpack.c.b16 %v1219, %v1218
        %v1225 = vpack.c.b16 %v1221, %v1220
        %1226 = vrot.lane.b32.xlu0 %v1222, 32
        %v1227 = vpop.permute.xlu0 %1226
        %1228 = vrot.lane.b32.xlu0 %v1223, 32
        %v1229 = vpop.permute.xlu0 %1228
        %1230 = vrot.lane.b32.xlu0 %v1224, 32
        %v1231 = vpop.permute.xlu0 %1230
        %1232 = vrot.lane.b32.xlu0 %v1225, 32
        %v1233 = vpop.permute.xlu0 %1232
        %v1242 = vunpack.c.l.b16 %v1150
        %v1243 = vunpack.c.l.b16 %v1151
        %v1244 = vunpack.c.l.b16 %v1152
        %v1245 = vunpack.c.l.b16 %v1153
        %v1246 = vunpack.c.l.b16 %v1154
        %v1247 = vunpack.c.l.b16 %v1155
        %v1248 = vunpack.c.l.b16 %v1156
        %v1249 = vunpack.c.l.b16 %v1157
        %v1250 = vpack.c.b16 %v1243, %v1242
        %v1251 = vpack.c.b16 %v1245, %v1244
        %v1252 = vpack.c.b16 %v1247, %v1246
        %v1253 = vpack.c.b16 %v1249, %v1248
        %1254 = vrot.lane.b32.xlu0 %v1250, 48
        %v1255 = vpop.permute.xlu0 %1254
        %1256 = vrot.lane.b32.xlu0 %v1251, 48
        %v1257 = vpop.permute.xlu0 %1256
        %1258 = vrot.lane.b32.xlu0 %v1252, 48
        %v1259 = vpop.permute.xlu0 %1258
        %1260 = vrot.lane.b32.xlu0 %v1253, 48
        %v1261 = vpop.permute.xlu0 %1260
        %v1264 = vsel %vm405, %v1174, %v1199
        %v1267 = vsel %vm405, %v1175, %v1201
        %v1270 = vsel %vm405, %v1176, %v1203
        %v1273 = vsel %vm405, %v1177, %v1205
        %vm1274 = vcmask 261120
        %v1276 = vsel %vm1274, %v1264, %v1227
        %v1278 = vsel %vm1274, %v1267, %v1229
        %v1280 = vsel %vm1274, %v1270, %v1231
        %v1282 = vsel %vm1274, %v1273, %v1233
        %vm1283 = vcmask 392192
        %v1285 = vsel %vm1283, %v1276, %v1255
        %v1288 = vsel %vm1283, %v1278, %v1257
        %v1291 = vsel %vm1283, %v1280, %v1259
        %v1294 = vsel %vm1283, %v1282, %v1261
        %v1296 = vld [vmem:[%s2] sm:$0xf]
        %v1297 = vld [vmem:[%s2 + $0x4] sm:$0xf]
        %v1300 = vunpack.c.l.b16 %v1296
        %v1301 = vunpack.c.l.b16 %v1297
        %v1302 = vpack.c.b16 %v1301, %v1300
        %v1304 = vsel %vm351, %v1302, 0
        %1306 = vmatpush.bf16.msra.mxu0 0
        %1307 = vmatpush.bf16.msra.mxu0 0
        %1308 = vmatpush.bf16.msra.mxu0 0
        %1309 = vmatpush.bf16.msra.mxu0 0
        %1310 = vmatpush.bf16.msra.mxu0 %v1294
        %1311 = vmatpush.bf16.msra.mxu0 %v1291
        %1312 = vmatpush.bf16.msra.mxu0 %v1288
        %1313 = vmatpush.bf16.msra.mxu0 %v1285
        %1314 = vmatmul.bf16.gmra.mxu0 %v1304
        %v1315 = vpop.f32.mrf.mxu0
        %v1316 = vadd.f32 %v197, %v1315
        %v1317 = vpop.f32.mrf.mxu0
        %v1318 = vadd.f32 %v198, %v1317
        %1319 = vdwg.mxu0
        %1320 = vst.msk [vmem:[%s190] sm:$0xff] %vm351, %v1316
        %1321 = vst.msk [vmem:[%s190 + $0x8] sm:$0xff] %vm351, %v1318
        %s1322 = sand.u32 %s115, 1
        %s1323 = scalar_lea.sflag [#allocation3], %s1322
        %s1324 = sand.u32 %s115, 1
        %s1325 = smul.addr %s1324, 16
        %s1326 = scalar_lea.vmem [#allocation2], %s1325
        // Predicated region
        $region37: #{tpu_custom_call.1} parent=35 // pred_check
          %p1327 = pneg %p125
        $region38: #{tpu_custom_call.1} parent=35 // pred_check_branch
          %1329 = sbr.rel (%p1327) target = $region40
        $region39: #{tpu_custom_call.1} parent=35 // pred_region
          %1331 = vsyncadd %s1323, 0
          %s1332 = smul.addr %s18, 2
          %s1333 = smul.addr %s1332, 8
          %s1334 = scalar_lea.hbm %s4, %s1333
          %s1335 = sshll.u32 %s1326, 4
          %s1336 = int_to_ptr.vmem [resolvable:$true] %s1335
          %s1337 = sshll.u32 %s1334, 4
          %s1338 = int_to_ptr.hbm [resolvable:$true] %s1337
          %1343 = dma.vmem_to_hbm [thread:$0]  %s1336, 256, %s1338, %s1323, 128, 128, 8
        $region40: #{tpu_custom_call.1} parent=35 // pred_fallthru
          _
      $region36: #{tpu_custom_call.1} parent=5 // pred_fallthru
        _
      %p1344 = scmp.le.s32.totalorder 2, %s13
      // Predicated region
      $region41: #{tpu_custom_call.1} parent=5 // pred_check
        %p1345 = pneg %p1344
      $region42: #{tpu_custom_call.1} parent=5 // pred_check_branch
        %1347 = sbr.rel (%p1345) target = $region44
      $region43: #{tpu_custom_call.1} parent=5 // pred_region
        %s1348 = ssub.s32 %s13, 2
        // Predicated region
        $region45: #{tpu_custom_call.1} parent=43 // pred_check
          %p1349 = pneg %p131
        $region46: #{tpu_custom_call.1} parent=43 // pred_check_branch
          %1351 = sbr.rel (%p1349) target = $region48
        $region47: #{tpu_custom_call.1} parent=43 // pred_region
          %s1352 = sand.u32 %s116, 1
          %s1353 = scalar_lea.sflag [#allocation3], %s1352
          %s1354 = sand.u32 %s116, 1
          %s1355 = smul.addr %s1354, 16
          %s1356 = scalar_lea.vmem [#allocation2], %s1355
          %1358 = dma.done %s1353, 256
        $region48: #{tpu_custom_call.1} parent=43 // pred_fallthru
          _
      $region44: #{tpu_custom_call.1} parent=5 // pred_fallthru
        _
    $region6: #{tpu_custom_call.1} parent=1 // loop_footer
      %s17 = sadd.s32 1, %s13
    $region7: #{tpu_custom_call.1} parent=1 // loop_footer_branch
      %12 = sbr.rel target = $region3
    $region8: #{tpu_custom_call.1} parent=1 // loop_exit
      _
    %1359 = vsyncpa [#allocation3], 1
    %s1360 = scalar_lea.sflag [#allocation3], 1
    %1361 = vsyncpa %s1360, 1

</llo_original>
